<compile_context>
chip_gen: v7x
topology: tpu7x:2x2x1
jax: 0.10.0
libtpu: 0.0.40
codegen_flags: <defaults>
</compile_context>

<pallas_src>
import jax
import jax.numpy as jnp
from jax import lax
from jax.experimental import pallas as pl
from jax.experimental.pallas import tpu as pltpu


def mlp_kernel(x_ref, w1_ref, b1_ref, w2_ref, b2_ref, w3_ref, b3_ref, o_ref):
    # x_ref : (TB, 4)  f32, row-major exactly as the caller holds it.
    # w*    : (out, in) f32, b1/b2: (32, 1) f32, b3: (3, 1) f32.
    # o_ref : (3, TB)  f32, lane-dense (batch on the 128-lane axis).
    x = x_ref[...]

    # Layer 1: contract the 4-wide feature dim of both operands (same
    # dimension_numbers as the ubiquitous q @ k.T attention pattern), so the
    # result lands lane-dense (32, TB) with no wrapper/XLU transpose of x.
    h1 = lax.dot_general(
        w1_ref[...], x, (((1,), (1,)), ((), ())),
        preferred_element_type=jnp.float32)                         # (32, TB)
    h1 = jnp.maximum(h1 + b1_ref[...], 0.0)

    # Layer 2: canonical matmul, stays lane-dense.
    h2 = jnp.dot(w2_ref[...], h1, preferred_element_type=jnp.float32)  # (32, TB)
    h2 = jnp.maximum(h2 + b2_ref[...], 0.0)

    # Layer 3: canonical matmul to (3, TB); full-lane unmasked stores.
    out = jnp.dot(w3_ref[...], h2, preferred_element_type=jnp.float32)  # (3, TB)
    o_ref[...] = out + b3_ref[...]


def _choose_tile(b, tb_max):
    """Pick a 128-multiple batch tile and padded batch size.

    Ensures >=2 grid steps for mid-size batches (so v7x's two TensorCores both
    get work via the 'parallel' axis) and caps the tile so the worst-case
    lane-padded VMEM footprint of the narrow (TB, 4)/(3, TB) blocks stays well
    under the 48 MiB limit we request (v7x has only 64 MiB physical VMEM).
    """
    b_al = pl.cdiv(b, 128) * 128
    n = pl.cdiv(b_al, tb_max)
    if n == 1 and b_al >= 2 * 128:
        n = 2
    tb = pl.cdiv(pl.cdiv(b_al, n), 128) * 128
    n = pl.cdiv(b_al, tb)
    return tb, n * tb


def mlp_forward(x, params, *, tb_max=32768):
    """x: (B, 4) float32 -> (B, 3) float32.  Same math as fc3(relu(fc2(relu(fc1(x)))))."""
    w1, b1, w2, b2, w3, b3 = params                    # w*: (out, in), b*: (out,)
    b = x.shape[0]
    d_in, d_h, d_out = w1.shape[1], w1.shape[0], w3.shape[0]

    tb, b_pad = _choose_tile(b, tb_max)
    grid = (b_pad // tb,)

    x_in = x.astype(jnp.float32)
    if b_pad != b:
        # Only needed when B is not tile-aligned; tile-aligned callers pay nothing.
        x_in = jnp.pad(x_in, ((0, b_pad - b), (0, 0)))

    w1c, w2c, w3c = (w.astype(jnp.float32) for w in (w1, w2, w3))
    b1c, b2c, b3c = (v.astype(jnp.float32).reshape(-1, 1) for v in (b1, b2, b3))

    const = lambda i: (0, 0)   # params stay VMEM-resident across the batch grid

    flops = 2 * b_pad * (d_in * d_h + d_h * d_h + d_h * d_out)
    bytes_accessed = (b_pad * (d_in + d_out) * 4
                      + (w1c.size + w2c.size + w3c.size
                         + b1c.size + b2c.size + b3c.size) * 4)

    out_fm = pl.pallas_call(
        mlp_kernel,
        out_shape=jax.ShapeDtypeStruct((d_out, b_pad), jnp.float32),
        grid_spec=pltpu.PrefetchScalarGridSpec(
            num_scalar_prefetch=0,
            grid=grid,
            in_specs=[
                pl.BlockSpec((tb, d_in), lambda i: (i, 0)),   # x tile, row-major
                pl.BlockSpec((d_h, d_in), const),             # w1 (32, 4)
                pl.BlockSpec((d_h, 1), const),                # b1 (32, 1)
                pl.BlockSpec((d_h, d_h), const),              # w2 (32, 32)
                pl.BlockSpec((d_h, 1), const),                # b2 (32, 1)
                pl.BlockSpec((d_out, d_h), const),            # w3 (3, 32)
                pl.BlockSpec((d_out, 1), const),              # b3 (3, 1)
            ],
            out_specs=pl.BlockSpec((d_out, tb), lambda i: (0, i)),
        ),
        compiler_params=pltpu.CompilerParams(
            dimension_semantics=("parallel",),
            vmem_limit_bytes=48 * 1024 * 1024,   # safe on v7x (64 MiB) and below
        ),
        cost_estimate=pl.CostEstimate(
            flops=flops, transcendentals=0, bytes_accessed=bytes_accessed),
    )(x_in, w1c, b1c, w2c, b2c, w3c, b3c)

    # Kernel output is lane-dense (3, B_pad) so in-kernel stores are full-lane.
    # The thin (3, B) -> (B, 3) conversion to the PyTorch layout is left to XLA
    # (doing it in-kernel would serialize on B/8 masked partial stores).
    return out_fm[:, :b].T


def init_params(key):
    # Deterministic synthetic init matching nn.Linear shapes: W (out, in), b (out,).
    k1, k2, k3, k4, k5, k6 = jax.random.split(key, 6)

    def lin(kw, kb, fan_in, fan_out):
        bound = 1.0 / jnp.sqrt(fan_in)
        w = jax.random.uniform(kw, (fan_out, fan_in), jnp.float32, -bound, bound)
        b = jax.random.uniform(kb, (fan_out,), jnp.float32, -bound, bound)
        return w, b

    w1, b1 = lin(k1, k2, 4, 32)
    w2, b2 = lin(k3, k4, 32, 32)
    w3, b3 = lin(k5, k6, 32, 3)
    return w1, b1, w2, b2, w3, b3


if __name__ == "__main__":
    key = jax.random.PRNGKey(0)
    kx, kp = jax.random.split(key)
    params = init_params(kp)
    x = jax.random.normal(kx, (8, 4), jnp.float32)

    out = jax.jit(mlp_forward)(x, params)
    out = jax.block_until_ready(out)

    # Pure-JAX f32 reference of the same forward pass.
    w1, b1, w2, b2, w3, b3 = params
    ref = jnp.maximum(x @ w1.T + b1, 0.0)
    ref = jnp.maximum(ref @ w2.T + b2, 0.0)
    ref = ref @ w3.T + b3

    assert out.shape == (8, 3)
    err = jnp.max(jnp.abs(out - ref))
    assert jnp.allclose(out, ref, atol=2e-2, rtol=2e-2), f"max abs err {err}"

    print("KERNEL_OK")
</pallas_src>

<mosaic_0001>
module attributes {stable_mosaic.version = 11 : i64} {
  func.func @mlp_kernel(%arg0: i32, %arg1: memref<128x4xf32, #tpu.memory_space<vmem>>, %arg2: memref<32x4xf32, #tpu.memory_space<vmem>>, %arg3: memref<32x1xf32, #tpu.memory_space<vmem>>, %arg4: memref<32x32xf32, #tpu.memory_space<vmem>>, %arg5: memref<32x1xf32, #tpu.memory_space<vmem>>, %arg6: memref<3x32xf32, #tpu.memory_space<vmem>>, %arg7: memref<3x1xf32, #tpu.memory_space<vmem>>, %arg8: memref<3x128xf32, #tpu.memory_space<vmem>>) attributes {dimension_semantics = [#tpu.dimension_semantics<parallel>], iteration_bounds = array<i64: 1>, scalar_prefetch = 0 : i64, scratch_operands = 0 : i64, tpu.core_type = #tpu.core_type<tc>, window_params = [{transform_indices = @transform_0, window_bounds = array<i64: 128, 4>}, {pipeline_mode = #tpu.pipeline_mode<synchronous>, transform_indices = @transform_1, window_bounds = array<i64: 32, 4>}, {pipeline_mode = #tpu.pipeline_mode<synchronous>, transform_indices = @transform_2, window_bounds = array<i64: 32, 1>}, {pipeline_mode = #tpu.pipeline_mode<synchronous>, transform_indices = @transform_3, window_bounds = array<i64: 32, 32>}, {pipeline_mode = #tpu.pipeline_mode<synchronous>, transform_indices = @transform_4, window_bounds = array<i64: 32, 1>}, {pipeline_mode = #tpu.pipeline_mode<synchronous>, transform_indices = @transform_5, window_bounds = array<i64: 3, 32>}, {pipeline_mode = #tpu.pipeline_mode<synchronous>, transform_indices = @transform_6, window_bounds = array<i64: 3, 1>}, {transform_indices = @transform_7, window_bounds = array<i64: 3, 128>}]} {
    %c0 = arith.constant 0 : index
    %c0_0 = arith.constant 0 : index
    %0 = vector.load %arg1[%c0, %c0_0] : memref<128x4xf32, #tpu.memory_space<vmem>>, vector<128x4xf32>
    %c0_1 = arith.constant 0 : index
    %c0_2 = arith.constant 0 : index
    %1 = vector.load %arg2[%c0_1, %c0_2] : memref<32x4xf32, #tpu.memory_space<vmem>>, vector<32x4xf32>
    %cst = arith.constant dense<0.000000e+00> : vector<32x128xf32>
    %2 = tpu.matmul %1, %0, %cst {dimension_numbers = #tpu.dot_dimension_numbers<[1], [1], [0], [0], [0, 0, 1, 0], [], []>} : vector<32x4xf32>, vector<128x4xf32>, vector<32x128xf32> -> vector<32x128xf32>
    %c0_3 = arith.constant 0 : index
    %c0_4 = arith.constant 0 : index
    %3 = vector.load %arg3[%c0_3, %c0_4] : memref<32x1xf32, #tpu.memory_space<vmem>>, vector<32x1xf32>
    %4 = vector.broadcast %3 : vector<32x1xf32> to vector<32x128xf32>
    %5 = arith.addf %2, %4 : vector<32x128xf32>
    %cst_5 = arith.constant 0.000000e+00 : f32
    %6 = vector.broadcast %cst_5 : f32 to vector<32x128xf32>
    %7 = arith.maximumf %5, %6 : vector<32x128xf32>
    %c0_6 = arith.constant 0 : index
    %c0_7 = arith.constant 0 : index
    %8 = vector.load %arg4[%c0_6, %c0_7] : memref<32x32xf32, #tpu.memory_space<vmem>>, vector<32x32xf32>
    %cst_8 = arith.constant dense<0.000000e+00> : vector<32x128xf32>
    %9 = tpu.matmul %8, %7, %cst_8 {dimension_numbers = #tpu.dot_dimension_numbers<[1], [0], [0], [1], [0, 0, 1, 1], [], []>} : vector<32x32xf32>, vector<32x128xf32>, vector<32x128xf32> -> vector<32x128xf32>
    %c0_9 = arith.constant 0 : index
    %c0_10 = arith.constant 0 : index
    %10 = vector.load %arg5[%c0_9, %c0_10] : memref<32x1xf32, #tpu.memory_space<vmem>>, vector<32x1xf32>
    %11 = vector.broadcast %10 : vector<32x1xf32> to vector<32x128xf32>
    %12 = arith.addf %9, %11 : vector<32x128xf32>
    %cst_11 = arith.constant 0.000000e+00 : f32
    %13 = vector.broadcast %cst_11 : f32 to vector<32x128xf32>
    %14 = arith.maximumf %12, %13 : vector<32x128xf32>
    %c0_12 = arith.constant 0 : index
    %c0_13 = arith.constant 0 : index
    %15 = vector.load %arg6[%c0_12, %c0_13] : memref<3x32xf32, #tpu.memory_space<vmem>>, vector<3x32xf32>
    %cst_14 = arith.constant dense<0.000000e+00> : vector<3x128xf32>
    %16 = tpu.matmul %15, %14, %cst_14 {dimension_numbers = #tpu.dot_dimension_numbers<[1], [0], [0], [1], [0, 0, 1, 1], [], []>} : vector<3x32xf32>, vector<32x128xf32>, vector<3x128xf32> -> vector<3x128xf32>
    %c0_15 = arith.constant 0 : index
    %c0_16 = arith.constant 0 : index
    %17 = vector.load %arg7[%c0_15, %c0_16] : memref<3x1xf32, #tpu.memory_space<vmem>>, vector<3x1xf32>
    %18 = vector.broadcast %17 : vector<3x1xf32> to vector<3x128xf32>
    %19 = arith.addf %16, %18 : vector<3x128xf32>
    %c0_17 = arith.constant 0 : index
    %c0_18 = arith.constant 0 : index
    %20 = vector.load %arg8[%c0_17, %c0_18] : memref<3x128xf32, #tpu.memory_space<vmem>>, vector<3x128xf32>
    tpu.vector_store %arg8[%c0_17, %c0_18], %19 {strides = array<i32>} : memref<3x128xf32, #tpu.memory_space<vmem>>, vector<3x128xf32>,
    return
  }
  func.func @transform_0(%arg0: i32) -> (i32, i32) {
    %c0_i32 = arith.constant 0 : i32
    %c0_i32_0 = arith.constant 0 : i32
    return %arg0, %c0_i32 : i32, i32
  }
  func.func @transform_1(%arg0: i32) -> (i32, i32) {
    %c0_i32 = arith.constant 0 : i32
    %c0_i32_0 = arith.constant 0 : i32
    %c0_i32_1 = arith.constant 0 : i32
    return %c0_i32, %c0_i32_0 : i32, i32
  }
  func.func @transform_2(%arg0: i32) -> (i32, i32) {
    %c0_i32 = arith.constant 0 : i32
    %c0_i32_0 = arith.constant 0 : i32
    %c0_i32_1 = arith.constant 0 : i32
    return %c0_i32, %c0_i32_0 : i32, i32
  }
  func.func @transform_3(%arg0: i32) -> (i32, i32) {
    %c0_i32 = arith.constant 0 : i32
    %c0_i32_0 = arith.constant 0 : i32
    %c0_i32_1 = arith.constant 0 : i32
    return %c0_i32, %c0_i32_0 : i32, i32
  }
  func.func @transform_4(%arg0: i32) -> (i32, i32) {
    %c0_i32 = arith.constant 0 : i32
    %c0_i32_0 = arith.constant 0 : i32
    %c0_i32_1 = arith.constant 0 : i32
    return %c0_i32, %c0_i32_0 : i32, i32
  }
  func.func @transform_5(%arg0: i32) -> (i32, i32) {
    %c0_i32 = arith.constant 0 : i32
    %c0_i32_0 = arith.constant 0 : i32
    %c0_i32_1 = arith.constant 0 : i32
    return %c0_i32, %c0_i32_0 : i32, i32
  }
  func.func @transform_6(%arg0: i32) -> (i32, i32) {
    %c0_i32 = arith.constant 0 : i32
    %c0_i32_0 = arith.constant 0 : i32
    %c0_i32_1 = arith.constant 0 : i32
    return %c0_i32, %c0_i32_0 : i32, i32
  }
  func.func @transform_7(%arg0: i32) -> (i32, i32) {
    %c0_i32 = arith.constant 0 : i32
    %c0_i32_0 = arith.constant 0 : i32
    return %c0_i32, %arg0 : i32, i32
  }
}

</mosaic_0001>

<llo_original>
// kernel: mlp_forward.1
$region0: #{mlp_forward.1}
  #allocation0 [shape = 'u32[]', space=smem, size = 0x4, offset = 0x4, fixed_abs, tag = 'smem constant byte address 0x4 - core index']
  #allocation1 [shape = 'u32[144,128]{1,0:T(1,128)}', space=vmem, size = 0x12000, scoped, tag = 'internal scratch']
  %s0 = inlined_call_operand.vmem [shape: f32[128,4], index: 0, kind: input, shape index: {}]
  %s1 = inlined_call_operand.vmem [shape: f32[32,4], index: 1, kind: input, shape index: {}]
  %s2 = inlined_call_operand.vmem [shape: f32[32,1], index: 2, kind: input, shape index: {}]
  %s3 = inlined_call_operand.vmem [shape: f32[32,32], index: 3, kind: input, shape index: {}]
  %s4 = inlined_call_operand.vmem [shape: f32[32,1], index: 4, kind: input, shape index: {}]
  %s5 = inlined_call_operand.vmem [shape: f32[3,32], index: 5, kind: input, shape index: {}]
  %s6 = inlined_call_operand.vmem [shape: f32[3,1], index: 6, kind: input, shape index: {}]
  %s7 = inlined_call_operand.vmem [shape: f32[3,128], index: 7, kind: output, shape index: {}]
  %s8 = sld [smem:[#allocation0]]
  $region38: #{mlp_forward.1} parent=0
    _
  %s10 = ssub.s32 1, %s8
  %s11 = scalar_select 0, %s10, %s8
  // Predicated region
  $region2: #{mlp_forward.1} parent=0 // pred_check
    _
  $region3: #{mlp_forward.1} parent=0 // pred_check_branch
    %13 = sbr.rel (0) target = $region5
  $region4: #{mlp_forward.1} parent=0 // pred_region
    _
  $region5: #{mlp_forward.1} parent=0 // pred_fallthru
    _
  // Predicated region
  $region6: #{mlp_forward.1} parent=0 // pred_check
    _
  $region7: #{mlp_forward.1} parent=0 // pred_check_branch
    %15 = sbr.rel (0) target = $region9
  $region8: #{mlp_forward.1} parent=0 // pred_region
    _
  $region9: #{mlp_forward.1} parent=0 // pred_fallthru
    _
  // Predicated region
  $region10: #{mlp_forward.1} parent=0 // pred_check
    _
  $region11: #{mlp_forward.1} parent=0 // pred_check_branch
    %17 = sbr.rel (0) target = $region13
  $region12: #{mlp_forward.1} parent=0 // pred_region
    _
  $region13: #{mlp_forward.1} parent=0 // pred_fallthru
    _
  // Predicated region
  $region14: #{mlp_forward.1} parent=0 // pred_check
    _
  $region15: #{mlp_forward.1} parent=0 // pred_check_branch
    %19 = sbr.rel (0) target = $region17
  $region16: #{mlp_forward.1} parent=0 // pred_region
    _
  $region17: #{mlp_forward.1} parent=0 // pred_fallthru
    _
  // Predicated region
  $region18: #{mlp_forward.1} parent=0 // pred_check
    _
  $region19: #{mlp_forward.1} parent=0 // pred_check_branch
    %21 = sbr.rel (0) target = $region21
  $region20: #{mlp_forward.1} parent=0 // pred_region
    _
  $region21: #{mlp_forward.1} parent=0 // pred_fallthru
    _
  // Predicated region
  $region22: #{mlp_forward.1} parent=0 // pred_check
    _
  $region23: #{mlp_forward.1} parent=0 // pred_check_branch
    %23 = sbr.rel (0) target = $region25
  $region24: #{mlp_forward.1} parent=0 // pred_region
    _
  $region25: #{mlp_forward.1} parent=0 // pred_fallthru
    _
  // Predicated region
  $region26: #{mlp_forward.1} parent=0 // pred_check
    _
  $region27: #{mlp_forward.1} parent=0 // pred_check_branch
    %25 = sbr.rel (0) target = $region29
  $region28: #{mlp_forward.1} parent=0 // pred_region
    _
  $region29: #{mlp_forward.1} parent=0 // pred_fallthru
    _
  %v26 = vld [vmem:[%s0] sm:$0xff]
  %v27 = vld [vmem:[%s0 + $0x8] sm:$0xff]
  %v28 = vld [vmem:[%s0 + $0x10] sm:$0xff]
  %v29 = vld [vmem:[%s0 + $0x18] sm:$0xff]
  %v30 = vld [vmem:[%s0 + $0x20] sm:$0xff]
  %v31 = vld [vmem:[%s0 + $0x28] sm:$0xff]
  %v32 = vld [vmem:[%s0 + $0x30] sm:$0xff]
  %v33 = vld [vmem:[%s0 + $0x38] sm:$0xff]
  %v34 = vld [vmem:[%s0 + $0x40] sm:$0xff]
  %v35 = vld [vmem:[%s0 + $0x48] sm:$0xff]
  %v36 = vld [vmem:[%s0 + $0x50] sm:$0xff]
  %v37 = vld [vmem:[%s0 + $0x58] sm:$0xff]
  %v38 = vld [vmem:[%s0 + $0x60] sm:$0xff]
  %v39 = vld [vmem:[%s0 + $0x68] sm:$0xff]
  %v40 = vld [vmem:[%s0 + $0x70] sm:$0xff]
  %v41 = vld [vmem:[%s0 + $0x78] sm:$0xff]
  %v42 = vld [vmem:[%s1] sm:$0xff]
  %v43 = vld [vmem:[%s1 + $0x8] sm:$0xff]
  %v44 = vld [vmem:[%s1 + $0x10] sm:$0xff]
  %v45 = vld [vmem:[%s1 + $0x18] sm:$0xff]
  %v46 = vld [vmem:[%s2] sm:$0xff]
  %v47 = vld [vmem:[%s2 + $0x8] sm:$0xff]
  %v48 = vld [vmem:[%s2 + $0x10] sm:$0xff]
  %v49 = vld [vmem:[%s2 + $0x18] sm:$0xff]
  %51 = vset.pattern.permute.xlu0 0
  %52 = vperm.xlu0 %51, %v46
  %v53 = vpop.permute.xlu0 %52
  %56 = vset.pattern.permute.xlu0 0
  %57 = vperm.xlu0 %56, %v47
  %v58 = vpop.permute.xlu0 %57
  %61 = vset.pattern.permute.xlu0 0
  %62 = vperm.xlu0 %61, %v48
  %v63 = vpop.permute.xlu0 %62
  %66 = vset.pattern.permute.xlu0 0
  %67 = vperm.xlu0 %66, %v49
  %v68 = vpop.permute.xlu0 %67
  %vm70 = vcmask 31744
  %v72 = vsel %vm70, %v42, 0
  %v75 = vsel %vm70, %v43, 0
  %v78 = vsel %vm70, %v44, 0
  %v81 = vsel %vm70, %v45, 0
  %v84 = vsel %vm70, %v26, 0
  %v87 = vsel %vm70, %v27, 0
  %v90 = vsel %vm70, %v28, 0
  %v93 = vsel %vm70, %v29, 0
  %v96 = vsel %vm70, %v30, 0
  %v99 = vsel %vm70, %v31, 0
  %v102 = vsel %vm70, %v32, 0
  %v105 = vsel %vm70, %v33, 0
  %v108 = vsel %vm70, %v34, 0
  %v111 = vsel %vm70, %v35, 0
  %v114 = vsel %vm70, %v36, 0
  %v117 = vsel %vm70, %v37, 0
  %v120 = vsel %vm70, %v38, 0
  %v123 = vsel %vm70, %v39, 0
  %v126 = vsel %vm70, %v40, 0
  %v129 = vsel %vm70, %v41, 0
  %131 = vmatprep.subr.mxu0 0.0
  %132 = vmatpush1.xpose.msra.mxu0 %v84
  %133 = vmatprep.subr.mxu0 0.0
  %134 = vmatpush1.xpose.msra.mxu0 %v87
  %135 = vmatprep.subr.mxu0 0.0
  %136 = vmatpush1.xpose.msra.mxu0 %v90
  %137 = vmatprep.subr.mxu0 0.0
  %138 = vmatpush1.xpose.msra.mxu0 %v93
  %139 = vmatprep.subr.mxu0 0.0
  %140 = vmatpush1.xpose.msra.mxu0 %v96
  %141 = vmatprep.subr.mxu0 0.0
  %142 = vmatpush1.xpose.msra.mxu0 %v99
  %143 = vmatprep.subr.mxu0 0.0
  %144 = vmatpush1.xpose.msra.mxu0 %v102
  %145 = vmatprep.subr.mxu0 0.0
  %146 = vmatpush1.xpose.msra.mxu0 %v105
  %147 = vmatprep.subr.mxu0 0.0
  %148 = vmatpush1.xpose.msra.mxu0 %v108
  %149 = vmatprep.subr.mxu0 0.0
  %150 = vmatpush1.xpose.msra.mxu0 %v111
  %151 = vmatprep.subr.mxu0 0.0
  %152 = vmatpush1.xpose.msra.mxu0 %v114
  %153 = vmatprep.subr.mxu0 0.0
  %154 = vmatpush1.xpose.msra.mxu0 %v117
  %155 = vmatprep.subr.mxu0 0.0
  %156 = vmatpush1.xpose.msra.mxu0 %v120
  %157 = vmatprep.subr.mxu0 0.0
  %158 = vmatpush1.xpose.msra.mxu0 %v123
  %159 = vmatprep.subr.mxu0 0.0
  %160 = vmatpush1.xpose.msra.mxu0 %v126
  %161 = vmatprep.subr.mxu0 0.0
  %162 = vmatpush1.xpose.msra.mxu0 %v129
  %163 = vmatprep.subr.mxu0 0.0
  %164 = vmatpush1.xpose.msra.mxu0 0.0
  %165 = vmatprep.subr.mxu0 0.0
  %166 = vmatpush1.xpose.msra.mxu0 0.0
  %167 = vmatprep.subr.mxu0 0.0
  %168 = vmatpush1.xpose.msra.mxu0 0.0
  %169 = vmatprep.subr.mxu0 0.0
  %170 = vmatpush1.xpose.msra.mxu0 0.0
  %171 = vmatprep.subr.mxu0 0.0
  %172 = vmatpush1.xpose.msra.mxu0 0.0
  %173 = vmatprep.subr.mxu0 0.0
  %174 = vmatpush1.xpose.msra.mxu0 0.0
  %175 = vmatprep.subr.mxu0 0.0
  %176 = vmatpush1.xpose.msra.mxu0 0.0
  %177 = vmatprep.subr.mxu0 0.0
  %178 = vmatpush1.xpose.msra.mxu0 0.0
  %179 = vmatprep.subr.mxu0 0.0
  %180 = vmatpush1.xpose.msra.mxu0 0.0
  %181 = vmatprep.subr.mxu0 0.0
  %182 = vmatpush1.xpose.msra.mxu0 0.0
  %183 = vmatprep.subr.mxu0 0.0
  %184 = vmatpush1.xpose.msra.mxu0 0.0
  %185 = vmatprep.subr.mxu0 0.0
  %186 = vmatpush1.xpose.msra.mxu0 0.0
  %187 = vmatprep.subr.mxu0 0.0
  %188 = vmatpush1.xpose.msra.mxu0 0.0
  %189 = vmatprep.subr.mxu0 0.0
  %190 = vmatpush1.xpose.msra.mxu0 0.0
  %191 = vmatprep.subr.mxu0 0.0
  %192 = vmatpush1.xpose.msra.mxu0 0.0
  %193 = vmatprep.subr.mxu0 0.0
  %194 = vmatpush1.xpose.msra.mxu0 0.0
  %195 = vmatprep.mubr.f32.mxu0 0.0
  %196 = vmatmul.mubr.f32.gmra.mrb[0].mxu0 %v72
  %v197 = vpop.f32.mrb[0].mxu0
  %v198 = vadd.f32 %v53, %v197
  %v199 = vpop.f32.mrb[0].mxu0
  %200 = vmatprep.mubr.f32.mxu0 0.0
  %201 = vmatmul.mubr.f32.gmra.mrb[0].mxu0 %v75
  %v202 = vpop.f32.mrb[0].mxu0
  %v203 = vadd.f32 %v58, %v202
  %v204 = vpop.f32.mrb[0].mxu0
  %205 = vmatprep.mubr.f32.mxu0 0.0
  %206 = vmatmul.mubr.f32.gmra.mrb[0].mxu0 %v78
  %v207 = vpop.f32.mrb[0].mxu0
  %v208 = vadd.f32 %v63, %v207
  %v209 = vpop.f32.mrb[0].mxu0
  %210 = vmatprep.mubr.f32.mxu0 0.0
  %211 = vmatmul.mubr.f32.gmra.mrb[0].mxu0 %v81
  %v212 = vpop.f32.mrb[0].mxu0
  %v213 = vadd.f32 %v68, %v212
  %v214 = vpop.f32.mrb[0].mxu0
  %215 = vdwg.mxu0
  %v216 = vmax.f32 %v198, 0.0
  %v217 = vmax.f32 %v203, 0.0
  %v218 = vmax.f32 %v208, 0.0
  %v219 = vmax.f32 %v213, 0.0
  %v220 = vld [vmem:[%s3] sm:$0xff]
  %v221 = vld [vmem:[%s3 + $0x8] sm:$0xff]
  %v222 = vld [vmem:[%s3 + $0x10] sm:$0xff]
  %v223 = vld [vmem:[%s3 + $0x18] sm:$0xff]
  %v224 = vld [vmem:[%s4] sm:$0xff]
  %v225 = vld [vmem:[%s4 + $0x8] sm:$0xff]
  %v226 = vld [vmem:[%s4 + $0x10] sm:$0xff]
  %v227 = vld [vmem:[%s4 + $0x18] sm:$0xff]
  %229 = vset.pattern.permute.xlu0 0
  %230 = vperm.xlu0 %229, %v224
  %v231 = vpop.permute.xlu0 %230
  %234 = vset.pattern.permute.xlu0 0
  %235 = vperm.xlu0 %234, %v225
  %v236 = vpop.permute.xlu0 %235
  %239 = vset.pattern.permute.xlu0 0
  %240 = vperm.xlu0 %239, %v226
  %v241 = vpop.permute.xlu0 %240
  %244 = vset.pattern.permute.xlu0 0
  %245 = vperm.xlu0 %244, %v227
  %v246 = vpop.permute.xlu0 %245
  %vm248 = vcmask 261120
  %v250 = vsel %vm248, %v220, 0
  %v253 = vsel %vm248, %v221, 0
  %v256 = vsel %vm248, %v222, 0
  %v259 = vsel %vm248, %v223, 0
  %261 = vmatprep.subr.mxu0 0.0
  %262 = vmatpush1.msra.mxu0 %v216
  %263 = vmatprep.subr.mxu0 0.0
  %264 = vmatpush1.msra.mxu0 %v217
  %265 = vmatprep.subr.mxu0 0.0
  %266 = vmatpush1.msra.mxu0 %v218
  %267 = vmatprep.subr.mxu0 0.0
  %268 = vmatpush1.msra.mxu0 %v219
  %269 = vmatprep.subr.mxu0 0.0
  %270 = vmatpush1.msra.mxu0 0.0
  %271 = vmatprep.subr.mxu0 0.0
  %272 = vmatpush1.msra.mxu0 0.0
  %273 = vmatprep.subr.mxu0 0.0
  %274 = vmatpush1.msra.mxu0 0.0
  %275 = vmatprep.subr.mxu0 0.0
  %276 = vmatpush1.msra.mxu0 0.0
  %277 = vmatprep.subr.mxu0 0.0
  %278 = vmatpush1.msra.mxu0 0.0
  %279 = vmatprep.subr.mxu0 0.0
  %280 = vmatpush1.msra.mxu0 0.0
  %281 = vmatprep.subr.mxu0 0.0
  %282 = vmatpush1.msra.mxu0 0.0
  %283 = vmatprep.subr.mxu0 0.0
  %284 = vmatpush1.msra.mxu0 0.0
  %285 = vmatprep.subr.mxu0 0.0
  %286 = vmatpush1.msra.mxu0 0.0
  %287 = vmatprep.subr.mxu0 0.0
  %288 = vmatpush1.msra.mxu0 0.0
  %289 = vmatprep.subr.mxu0 0.0
  %290 = vmatpush1.msra.mxu0 0.0
  %291 = vmatprep.subr.mxu0 0.0
  %292 = vmatpush1.msra.mxu0 0.0
  %293 = vmatprep.subr.mxu0 0.0
  %294 = vmatpush1.msra.mxu0 0.0
  %295 = vmatprep.subr.mxu0 0.0
  %296 = vmatpush1.msra.mxu0 0.0
  %297 = vmatprep.subr.mxu0 0.0
  %298 = vmatpush1.msra.mxu0 0.0
  %299 = vmatprep.subr.mxu0 0.0
  %300 = vmatpush1.msra.mxu0 0.0
  %301 = vmatprep.subr.mxu0 0.0
  %302 = vmatpush1.msra.mxu0 0.0
  %303 = vmatprep.subr.mxu0 0.0
  %304 = vmatpush1.msra.mxu0 0.0
  %305 = vmatprep.subr.mxu0 0.0
  %306 = vmatpush1.msra.mxu0 0.0
  %307 = vmatprep.subr.mxu0 0.0
  %308 = vmatpush1.msra.mxu0 0.0
  %309 = vmatprep.subr.mxu0 0.0
  %310 = vmatpush1.msra.mxu0 0.0
  %311 = vmatprep.subr.mxu0 0.0
  %312 = vmatpush1.msra.mxu0 0.0
  %313 = vmatprep.subr.mxu0 0.0
  %314 = vmatpush1.msra.mxu0 0.0
  %315 = vmatprep.subr.mxu0 0.0
  %316 = vmatpush1.msra.mxu0 0.0
  %317 = vmatprep.subr.mxu0 0.0
  %318 = vmatpush1.msra.mxu0 0.0
  %319 = vmatprep.subr.mxu0 0.0
  %320 = vmatpush1.msra.mxu0 0.0
  %321 = vmatprep.subr.mxu0 0.0
  %322 = vmatpush1.msra.mxu0 0.0
  %323 = vmatprep.subr.mxu0 0.0
  %324 = vmatpush1.msra.mxu0 0.0
  %325 = vmatprep.mubr.f32.mxu0 0.0
  %326 = vmatmul.mubr.f32.gmra.mrb[0].mxu0 %v250
  %v327 = vpop.f32.mrb[0].mxu0
  %v328 = vadd.f32 %v231, %v327
  %v329 = vpop.f32.mrb[0].mxu0
  %330 = vmatprep.mubr.f32.mxu0 0.0
  %331 = vmatmul.mubr.f32.gmra.mrb[0].mxu0 %v253
  %v332 = vpop.f32.mrb[0].mxu0
  %v333 = vadd.f32 %v236, %v332
  %v334 = vpop.f32.mrb[0].mxu0
  %335 = vmatprep.mubr.f32.mxu0 0.0
  %336 = vmatmul.mubr.f32.gmra.mrb[0].mxu0 %v256
  %v337 = vpop.f32.mrb[0].mxu0
  %v338 = vadd.f32 %v241, %v337
  %v339 = vpop.f32.mrb[0].mxu0
  %340 = vmatprep.mubr.f32.mxu0 0.0
  %341 = vmatmul.mubr.f32.gmra.mrb[0].mxu0 %v259
  %v342 = vpop.f32.mrb[0].mxu0
  %v343 = vadd.f32 %v246, %v342
  %v344 = vpop.f32.mrb[0].mxu0
  %345 = vdwg.mxu0
  %v346 = vmax.f32 %v328, 0.0
  %v347 = vmax.f32 %v333, 0.0
  %v348 = vmax.f32 %v338, 0.0
  %v349 = vmax.f32 %v343, 0.0
  %v350 = vld [vmem:[%s5] sm:$0x7]
  %v351 = vld [vmem:[%s6] sm:$0x7]
  %353 = vset.pattern.permute.xlu0 0
  %354 = vperm.xlu0 %353, %v351
  %v355 = vpop.permute.xlu0 %354
  %v358 = vsel %vm248, %v350, 0
  %360 = vmatprep.subr.mxu0 0.0
  %361 = vmatpush1.msra.mxu0 %v346
  %362 = vmatprep.subr.mxu0 0.0
  %363 = vmatpush1.msra.mxu0 %v347
  %364 = vmatprep.subr.mxu0 0.0
  %365 = vmatpush1.msra.mxu0 %v348
  %366 = vmatprep.subr.mxu0 0.0
  %367 = vmatpush1.msra.mxu0 %v349
  %368 = vmatprep.subr.mxu0 0.0
  %369 = vmatpush1.msra.mxu0 0.0
  %370 = vmatprep.subr.mxu0 0.0
  %371 = vmatpush1.msra.mxu0 0.0
  %372 = vmatprep.subr.mxu0 0.0
  %373 = vmatpush1.msra.mxu0 0.0
  %374 = vmatprep.subr.mxu0 0.0
  %375 = vmatpush1.msra.mxu0 0.0
  %376 = vmatprep.subr.mxu0 0.0
  %377 = vmatpush1.msra.mxu0 0.0
  %378 = vmatprep.subr.mxu0 0.0
  %379 = vmatpush1.msra.mxu0 0.0
  %380 = vmatprep.subr.mxu0 0.0
  %381 = vmatpush1.msra.mxu0 0.0
  %382 = vmatprep.subr.mxu0 0.0
  %383 = vmatpush1.msra.mxu0 0.0
  %384 = vmatprep.subr.mxu0 0.0
  %385 = vmatpush1.msra.mxu0 0.0
  %386 = vmatprep.subr.mxu0 0.0
  %387 = vmatpush1.msra.mxu0 0.0
  %388 = vmatprep.subr.mxu0 0.0
  %389 = vmatpush1.msra.mxu0 0.0
  %390 = vmatprep.subr.mxu0 0.0
  %391 = vmatpush1.msra.mxu0 0.0
  %392 = vmatprep.subr.mxu0 0.0
  %393 = vmatpush1.msra.mxu0 0.0
  %394 = vmatprep.subr.mxu0 0.0
  %395 = vmatpush1.msra.mxu0 0.0
  %396 = vmatprep.subr.mxu0 0.0
  %397 = vmatpush1.msra.mxu0 0.0
  %398 = vmatprep.subr.mxu0 0.0
  %399 = vmatpush1.msra.mxu0 0.0
  %400 = vmatprep.subr.mxu0 0.0
  %401 = vmatpush1.msra.mxu0 0.0
  %402 = vmatprep.subr.mxu0 0.0
  %403 = vmatpush1.msra.mxu0 0.0
  %404 = vmatprep.subr.mxu0 0.0
  %405 = vmatpush1.msra.mxu0 0.0
  %406 = vmatprep.subr.mxu0 0.0
  %407 = vmatpush1.msra.mxu0 0.0
  %408 = vmatprep.subr.mxu0 0.0
  %409 = vmatpush1.msra.mxu0 0.0
  %410 = vmatprep.subr.mxu0 0.0
  %411 = vmatpush1.msra.mxu0 0.0
  %412 = vmatprep.subr.mxu0 0.0
  %413 = vmatpush1.msra.mxu0 0.0
  %414 = vmatprep.subr.mxu0 0.0
  %415 = vmatpush1.msra.mxu0 0.0
  %416 = vmatprep.subr.mxu0 0.0
  %417 = vmatpush1.msra.mxu0 0.0
  %418 = vmatprep.subr.mxu0 0.0
  %419 = vmatpush1.msra.mxu0 0.0
  %420 = vmatprep.subr.mxu0 0.0
  %421 = vmatpush1.msra.mxu0 0.0
  %422 = vmatprep.subr.mxu0 0.0
  %423 = vmatpush1.msra.mxu0 0.0
  %424 = vmatprep.mubr.f32.mxu0 0.0
  %425 = vmatmul.mubr.f32.gmra.mrb[0].mxu0 %v358
  %v426 = vpop.f32.mrb[0].mxu0
  %v427 = vadd.f32 %v355, %v426
  %v428 = vpop.f32.mrb[0].mxu0
  %429 = vdwg.mxu0
  %430 = vst [vmem:[%s7] sm:$0x7] %v427
  // Predicated region
  $region30: #{mlp_forward.1} parent=0 // pred_check
    _
  $region31: #{mlp_forward.1} parent=0 // pred_check_branch
    %432 = sbr.rel (0) target = $region33
  $region32: #{mlp_forward.1} parent=0 // pred_region
    _
  $region33: #{mlp_forward.1} parent=0 // pred_fallthru
    _
  // Predicated region
  $region34: #{mlp_forward.1} parent=0 // pred_check
    _
  $region35: #{mlp_forward.1} parent=0 // pred_check_branch
    %434 = sbr.rel (0) target = $region37
  $region36: #{mlp_forward.1} parent=0 // pred_region
    _
  $region37: #{mlp_forward.1} parent=0 // pred_fallthru
    _

</llo_original>
